<compile_context>
chip_gen: v6e
topology: v6e:2x2x1
jax: 0.10.0
libtpu: 0.0.40
codegen_flags: <defaults>
</compile_context>

<pallas_src>
import math

import jax
import jax.numpy as jnp
from jax.experimental import pallas as pl
from jax.experimental.pallas import tpu as pltpu

_MIB = 1024 * 1024


def _round_up(x: int, m: int) -> int:
    return ((x + m - 1) // m) * m


def _cdiv(a: int, b: int) -> int:
    return -(-a // b)


def _chip_info():
    """Returns (vmem_capacity_bytes, is_v5, is_v7x) with conservative fallbacks."""
    kind = ""
    try:
        kind = jax.devices()[0].device_kind.lower()
    except Exception:
        pass
    is_v5 = "v5" in kind
    is_v7 = ("v7" in kind) or ("7x" in kind)
    vmem_cap = None
    try:
        info = pltpu.get_tpu_info()
        vmem_cap = getattr(info, "vmem_capacity_bytes", None)
    except Exception:
        vmem_cap = None
    if not vmem_cap:
        vmem_cap = (64 if is_v7 else 128) * _MIB
    return int(vmem_cap), is_v5, is_v7


def _make_kernel(compute_dtype, relu_in_f32: bool):
    """Fused o = relu(h @ W1^T) @ W2^T with an optional K (dim_model) grid axis.

    Grid = (batch_tiles, k_tiles). Weights arrive pre-transposed:
      h_ref   : (TM, TK)              compute dtype
      w1t_ref : (TK, dim_clr_p)       compute dtype
      w2t_ref : (dim_clr_p, dim_clr_p) compute dtype
      o_ref   : (TM, dim_clr_p)       kernel output dtype
      acc_ref : (TM, dim_clr_p)       f32 scratch accumulator
    """
    def kernel(h_ref, w1t_ref, w2t_ref, o_ref, acc_ref):
        k = pl.program_id(1)

        @pl.when(k == 0)
        def _():
            acc_ref[...] = jnp.zeros_like(acc_ref)

        # projector: canonical (M,K)@(K,N) MXU feed, f32 accumulation.
        acc_ref[...] += jnp.dot(h_ref[...], w1t_ref[...],
                                preferred_element_type=jnp.float32)

        @pl.when(k == pl.num_programs(1) - 1)
        def _():
            act = acc_ref[...]
            if relu_in_f32:
                # v5e: no bf16 VALU path -> ReLU in f32, then downcast.
                act = jnp.maximum(act, 0.0).astype(compute_dtype)
            else:
                # v6e/v7x: downcast first, ReLU in bf16 (identical result).
                act = jnp.maximum(act.astype(compute_dtype), 0.0)
            # mapper: act @ W2^T (pre-transposed), f32 accumulation.
            out = jnp.dot(act, w2t_ref[...], preferred_element_type=jnp.float32)
            o_ref[...] = out.astype(o_ref.dtype)

    return kernel


def _pick_tiles(batch, dim_model, dim_clr_p, cbytes, kobytes, budget, is_v7):
    """Choose (tm, tk, nk, dim_model_p, vmem_usage) against the VMEM budget."""
    # --- K tiling: keep resident weights well under half the budget.
    w_full = (dim_model * dim_clr_p + dim_clr_p * dim_clr_p) * cbytes
    if w_full <= budget // 2:
        tk, nk, dim_model_p = dim_model, 1, dim_model
        resident_w = w_full                       # W1^T + W2^T, single-buffered
    else:
        tk = max(128, (min(2048, _round_up(dim_model, 128)) // 128) * 128)
        while (tk > 128 and
               (2 * tk * dim_clr_p + dim_clr_p * dim_clr_p) * cbytes > budget // 2):
            tk = max(128, ((tk // 2) // 128) * 128)
        dim_model_p = _round_up(dim_model, tk)
        nk = dim_model_p // tk
        resident_w = (2 * tk * dim_clr_p + dim_clr_p * dim_clr_p) * cbytes
        # TODO(synk): if W2 alone still exceeds the budget (very large dim_clr),
        # an additional N-tiling axis would be needed; not implemented here.

    # --- Batch tile: largest multiple of 8 (up to 2048) whose pipelined
    #     footprint fits the budget.
    tm = max(8, (min(2048, _round_up(batch, 8)) // 8) * 8)
    while True:
        usage = (2 * tm * tk * cbytes            # h tile, double-buffered
                 + 2 * tm * dim_clr_p * kobytes  # out tile, double-buffered
                 + tm * dim_clr_p * 4            # f32 accumulator scratch
                 + resident_w)
        if usage <= budget or tm <= 8:
            break
        tm = max(8, ((tm // 2) // 8) * 8)

    # --- v7x: keep >=2 (>=4 for bigger batches) steps on the "parallel" batch
    #     axis so both TensorCores get work.
    if is_v7 and batch > 8:
        target_steps = 4 if batch >= 32 else 2
        tm = min(tm, max(8, _round_up(_cdiv(batch, target_steps), 8)))

    usage = (2 * tm * tk * cbytes + 2 * tm * dim_clr_p * kobytes
             + tm * dim_clr_p * 4 + resident_w)
    return tm, tk, nk, dim_model_p, usage


def simclr_projector(h: jax.Array, w1: jax.Array, w2: jax.Array,
                     *, compute_dtype=jnp.bfloat16) -> jax.Array:
    """h: (B, dim_model); w1: (dim_clr, dim_model); w2: (dim_clr, dim_clr)."""
    batch, dim_model = h.shape
    dim_clr = w1.shape[0]
    assert w1.shape == (dim_clr, dim_model)
    assert w2.shape == (dim_clr, dim_clr)
    out_dtype = h.dtype

    vmem_cap, is_v5, is_v7 = _chip_info()
    budget = int(0.75 * vmem_cap)               # ~96 MiB v5e/v6e, ~48 MiB v7x

    cbytes = jnp.dtype(compute_dtype).itemsize

    # Lane-dense output: pad contrastive dim to a multiple of 128 (unmasked
    # stores).  When dim_clr < 128 that padding would multiply output HBM
    # bytes, so the kernel then stores in the compute dtype (bf16) and the
    # wrapper casts back — the kernel is HBM-bandwidth bound.
    dim_clr_p = _round_up(max(dim_clr, 128), 128)
    kernel_out_dtype = compute_dtype if dim_clr < 128 else out_dtype
    kobytes = jnp.dtype(kernel_out_dtype).itemsize

    tm, tk, nk, dim_model_p, usage = _pick_tiles(
        batch, dim_model, dim_clr_p, cbytes, kobytes, budget, is_v7)

    # Pre-transpose + pad + cast weights ONCE in the wrapper (one XLA op, fused
    # with the bf16 cast).  Zero-padding is exact: padded activation columns
    # are relu(0)=0 and padded W2^T rows/cols contribute/produce zeros that are
    # sliced off below.
    w1t_c = jnp.pad(w1.T, ((0, dim_model_p - dim_model),
                           (0, dim_clr_p - dim_clr))).astype(compute_dtype)
    w2t_c = jnp.pad(w2.T, ((0, dim_clr_p - dim_clr),
                           (0, dim_clr_p - dim_clr))).astype(compute_dtype)

    b_pad = _round_up(batch, tm)
    h_c = h.astype(compute_dtype)
    if b_pad != batch or dim_model_p != dim_model:
        h_c = jnp.pad(h_c, ((0, b_pad - batch), (0, dim_model_p - dim_model)))

    grid = (b_pad // tm, nk)

    flops = 2 * b_pad * dim_model_p * dim_clr_p + 2 * b_pad * dim_clr_p * dim_clr_p
    bytes_accessed = (b_pad * dim_model_p * cbytes
                      + dim_model_p * dim_clr_p * cbytes
                      + dim_clr_p * dim_clr_p * cbytes
                      + b_pad * dim_clr_p * kobytes)

    # vmem_limit: actual footprint + headroom (conservatively allow for the
    # weights ending up double-buffered if the single-buffer hint is rejected).
    usage_cons = usage + (tk * dim_clr_p + dim_clr_p * dim_clr_p) * cbytes
    vmem_limit = int(min(max(16 * _MIB, usage_cons + 8 * _MIB),
                         int(0.9 * vmem_cap)))

    kernel = _make_kernel(compute_dtype, relu_in_f32=is_v5)

    def build(single_buffer_weights: bool):
        if single_buffer_weights:
            w2_spec = pl.BlockSpec((dim_clr_p, dim_clr_p), lambda i, k: (0, 0),
                                   pipeline_mode=pl.Buffered(1))
            if nk == 1:
                w1_spec = pl.BlockSpec((tk, dim_clr_p), lambda i, k: (k, 0),
                                       pipeline_mode=pl.Buffered(1))
            else:
                # W1 tiles change with k -> keep default double-buffering.
                w1_spec = pl.BlockSpec((tk, dim_clr_p), lambda i, k: (k, 0))
        else:
            w2_spec = pl.BlockSpec((dim_clr_p, dim_clr_p), lambda i, k: (0, 0))
            w1_spec = pl.BlockSpec((tk, dim_clr_p), lambda i, k: (k, 0))

        return pl.pallas_call(
            kernel,
            out_shape=jax.ShapeDtypeStruct((b_pad, dim_clr_p), kernel_out_dtype),
            grid=grid,
            in_specs=[
                pl.BlockSpec((tm, tk), lambda i, k: (i, k)),   # h: streamed
                w1_spec,                                       # W1^T (resident)
                w2_spec,                                       # W2^T (resident)
            ],
            out_specs=pl.BlockSpec((tm, dim_clr_p), lambda i, k: (i, 0)),
            scratch_shapes=[pltpu.VMEM((tm, dim_clr_p), jnp.float32)],
            compiler_params=pltpu.CompilerParams(
                dimension_semantics=("parallel", "arbitrary"),
                vmem_limit_bytes=vmem_limit,
            ),
            cost_estimate=pl.CostEstimate(
                flops=flops, transcendentals=0, bytes_accessed=bytes_accessed),
        )

    try:
        out = build(True)(h_c, w1t_c, w2t_c)
    except Exception:
        # Fallback if single-buffered (Buffered(1)) weight specs are rejected.
        out = build(False)(h_c, w1t_c, w2t_c)

    return out[:batch, :dim_clr].astype(out_dtype)


def init_params(key, dim_model: int, dim_clr: int):
    """Deterministic init matching nn.Linear default: U(-1/sqrt(fan_in), 1/sqrt(fan_in))."""
    k1, k2 = jax.random.split(key)
    bound1 = 1.0 / math.sqrt(dim_model)
    bound2 = 1.0 / math.sqrt(dim_clr)
    w1 = jax.random.uniform(k1, (dim_clr, dim_model), jnp.float32, -bound1, bound1)
    w2 = jax.random.uniform(k2, (dim_clr, dim_clr), jnp.float32, -bound2, bound2)
    return w1, w2


if __name__ == "__main__":
    key = jax.random.PRNGKey(0)
    k_h, k_p = jax.random.split(key)

    batch = 8
    dim_model = 64   # backbone latent dim
    dim_clr = 32     # contrastive latent dim (< dim_model)

    h = jax.random.normal(k_h, (batch, dim_model), jnp.float32)
    w1, w2 = init_params(k_p, dim_model, dim_clr)

    z = simclr_projector(h, w1, w2)
    jax.block_until_ready(z)
    assert z.shape == (batch, dim_clr)
    assert z.dtype == h.dtype

    # (a) full-f32 reference (loose: kernel uses bf16 MXU operands and, for
    #     dim_clr < 128, a bf16 output store).
    z_f32 = jnp.maximum(h @ w1.T, 0.0) @ w2.T
    assert jnp.allclose(z, z_f32, atol=5e-2, rtol=5e-2)

    # (b) mirrored bf16-operand / f32-accumulate reference (tight).
    h_bf = h.astype(jnp.bfloat16)
    act = jnp.maximum(jnp.dot(h_bf, w1.T.astype(jnp.bfloat16),
                              preferred_element_type=jnp.float32), 0.0)
    z_ref = jnp.dot(act.astype(jnp.bfloat16), w2.T.astype(jnp.bfloat16),
                    preferred_element_type=jnp.float32)
    z_ref = z_ref.astype(jnp.bfloat16).astype(h.dtype)  # kernel's bf16 store path
    assert jnp.allclose(z, z_ref, atol=1e-2, rtol=1e-2)

    print("KERNEL_OK")
</pallas_src>

<mosaic_0001>
module attributes {stable_mosaic.version = 11 : i64} {
  func.func @kernel(%arg0: i32, %arg1: i32, %arg2: memref<8x64xbf16, #tpu.memory_space<vmem>>, %arg3: memref<64x128xbf16, #tpu.memory_space<vmem>>, %arg4: memref<128x128xbf16, #tpu.memory_space<vmem>>, %arg5: memref<8x128xbf16, #tpu.memory_space<vmem>>, %arg6: memref<8x128xf32, #tpu.memory_space<vmem>>) attributes {dimension_semantics = [#tpu.dimension_semantics<parallel>, #tpu.dimension_semantics<arbitrary>], iteration_bounds = array<i64: 1, 1>, scalar_prefetch = 0 : i64, scratch_operands = 1 : i64, tpu.core_type = #tpu.core_type<tc>, window_params = [{transform_indices = @transform_0, window_bounds = array<i64: 8, 64>}, {pipeline_mode = #tpu.pipeline_mode<synchronous>, transform_indices = @transform_1, window_bounds = array<i64: 64, 128>}, {pipeline_mode = #tpu.pipeline_mode<synchronous>, transform_indices = @transform_2, window_bounds = array<i64: 128, 128>}, {transform_indices = @transform_3, window_bounds = array<i64: 8, 128>}]} {
    %c0_i32 = arith.constant 0 : i32
    %0 = arith.cmpi eq, %arg1, %c0_i32 : i32
    %1 = arith.extui %0 : i1 to i32
    %c0_i32_0 = arith.constant 0 : i32
    %2 = arith.cmpi ne, %1, %c0_i32_0 : i32
    scf.if %2 {
      %cst_10 = arith.constant 0.000000e+00 : f32
      %12 = vector.broadcast %cst_10 : f32 to vector<8x128xf32>
      %c0_11 = arith.constant 0 : index
      %c0_12 = arith.constant 0 : index
      %13 = vector.load %arg6[%c0_11, %c0_12] : memref<8x128xf32, #tpu.memory_space<vmem>>, vector<8x128xf32>
      tpu.vector_store %arg6[%c0_11, %c0_12], %12 {strides = array<i32>} : memref<8x128xf32, #tpu.memory_space<vmem>>, vector<8x128xf32>,
    } else {
    }
    %c0 = arith.constant 0 : index
    %c0_1 = arith.constant 0 : index
    %3 = vector.load %arg6[%c0, %c0_1] : memref<8x128xf32, #tpu.memory_space<vmem>>, vector<8x128xf32>
    %c0_2 = arith.constant 0 : index
    %c0_3 = arith.constant 0 : index
    %4 = vector.load %arg2[%c0_2, %c0_3] : memref<8x64xbf16, #tpu.memory_space<vmem>>, vector<8x64xbf16>
    %c0_4 = arith.constant 0 : index
    %c0_5 = arith.constant 0 : index
    %5 = vector.load %arg3[%c0_4, %c0_5] : memref<64x128xbf16, #tpu.memory_space<vmem>>, vector<64x128xbf16>
    %cst = arith.constant dense<0.000000e+00> : vector<8x128xf32>
    %6 = tpu.matmul %4, %5, %cst {dimension_numbers = #tpu.dot_dimension_numbers<[1], [0], [0], [1], [0, 0, 1, 1], [], []>} : vector<8x64xbf16>, vector<64x128xbf16>, vector<8x128xf32> -> vector<8x128xf32>
    %7 = arith.addf %3, %6 : vector<8x128xf32>
    %c0_6 = arith.constant 0 : index
    %c0_7 = arith.constant 0 : index
    %8 = vector.load %arg6[%c0_6, %c0_7] : memref<8x128xf32, #tpu.memory_space<vmem>>, vector<8x128xf32>
    tpu.vector_store %arg6[%c0_6, %c0_7], %7 {strides = array<i32>} : memref<8x128xf32, #tpu.memory_space<vmem>>, vector<8x128xf32>,
    %c0_i32_8 = arith.constant 0 : i32
    %9 = arith.cmpi eq, %arg1, %c0_i32_8 : i32
    %10 = arith.extui %9 : i1 to i32
    %c0_i32_9 = arith.constant 0 : i32
    %11 = arith.cmpi ne, %10, %c0_i32_9 : i32
    scf.if %11 {
      %c0_10 = arith.constant 0 : index
      %c0_11 = arith.constant 0 : index
      %12 = vector.load %arg6[%c0_10, %c0_11] : memref<8x128xf32, #tpu.memory_space<vmem>>, vector<8x128xf32>
      %13 = arith.truncf %12 : vector<8x128xf32> to vector<8x128xbf16>
      %cst_12 = arith.constant 0.000000e+00 : bf16
      %14 = vector.broadcast %cst_12 : bf16 to vector<8x128xbf16>
      %15 = arith.maximumf %13, %14 : vector<8x128xbf16>
      %c0_13 = arith.constant 0 : index
      %c0_14 = arith.constant 0 : index
      %16 = vector.load %arg4[%c0_13, %c0_14] : memref<128x128xbf16, #tpu.memory_space<vmem>>, vector<128x128xbf16>
      %cst_15 = arith.constant dense<0.000000e+00> : vector<8x128xf32>
      %17 = tpu.matmul %15, %16, %cst_15 {dimension_numbers = #tpu.dot_dimension_numbers<[1], [0], [0], [1], [0, 0, 1, 1], [], []>} : vector<8x128xbf16>, vector<128x128xbf16>, vector<8x128xf32> -> vector<8x128xf32>
      %18 = arith.truncf %17 : vector<8x128xf32> to vector<8x128xbf16>
      %c0_16 = arith.constant 0 : index
      %c0_17 = arith.constant 0 : index
      %19 = vector.load %arg5[%c0_16, %c0_17] : memref<8x128xbf16, #tpu.memory_space<vmem>>, vector<8x128xbf16>
      tpu.vector_store %arg5[%c0_16, %c0_17], %18 {strides = array<i32>} : memref<8x128xbf16, #tpu.memory_space<vmem>>, vector<8x128xbf16>,
    } else {
    }
    return
  }
  func.func @transform_0(%arg0: i32, %arg1: i32) -> (i32, i32) {
    %c0_i32 = arith.constant 0 : i32
    return %arg0, %arg1 : i32, i32
  }
  func.func @transform_1(%arg0: i32, %arg1: i32) -> (i32, i32) {
    %c0_i32 = arith.constant 0 : i32
    %c0_i32_0 = arith.constant 0 : i32
    return %arg1, %c0_i32 : i32, i32
  }
  func.func @transform_2(%arg0: i32, %arg1: i32) -> (i32, i32) {
    %c0_i32 = arith.constant 0 : i32
    %c0_i32_0 = arith.constant 0 : i32
    %c0_i32_1 = arith.constant 0 : i32
    return %c0_i32, %c0_i32_0 : i32, i32
  }
  func.func @transform_3(%arg0: i32, %arg1: i32) -> (i32, i32) {
    %c0_i32 = arith.constant 0 : i32
    %c0_i32_0 = arith.constant 0 : i32
    return %arg0, %c0_i32 : i32, i32
  }
}

module attributes {stable_mosaic.version = 11 : i64} {
  func.func @kernel(%arg0: i32, %arg1: i32, %arg2: memref<8x64xbf16, #tpu.memory_space<vmem>>, %arg3: memref<64x128xbf16, #tpu.memory_space<vmem>>, %arg4: memref<128x128xbf16, #tpu.memory_space<vmem>>, %arg5: memref<8x128xbf16, #tpu.memory_space<vmem>>, %arg6: memref<8x128xf32, #tpu.memory_space<vmem>>) attributes {dimension_semantics = [#tpu.dimension_semantics<parallel>, #tpu.dimension_semantics<arbitrary>], iteration_bounds = array<i64: 1, 1>, scalar_prefetch = 0 : i64, scratch_operands = 1 : i64, tpu.core_type = #tpu.core_type<tc>, window_params = [{transform_indices = @transform_0, window_bounds = array<i64: 8, 64>}, {transform_indices = @transform_1, window_bounds = array<i64: 64, 128>}, {pipeline_mode = #tpu.pipeline_mode<synchronous>, transform_indices = @transform_2, window_bounds = array<i64: 128, 128>}, {transform_indices = @transform_3, window_bounds = array<i64: 8, 128>}]} {
    %c0_i32 = arith.constant 0 : i32
    %0 = arith.cmpi eq, %arg1, %c0_i32 : i32
    %1 = arith.extui %0 : i1 to i32
    %c0_i32_0 = arith.constant 0 : i32
    %2 = arith.cmpi ne, %1, %c0_i32_0 : i32
    scf.if %2 {
      %cst_10 = arith.constant 0.000000e+00 : f32
      %12 = vector.broadcast %cst_10 : f32 to vector<8x128xf32>
      %c0_11 = arith.constant 0 : index
      %c0_12 = arith.constant 0 : index
      %13 = vector.load %arg6[%c0_11, %c0_12] : memref<8x128xf32, #tpu.memory_space<vmem>>, vector<8x128xf32>
      tpu.vector_store %arg6[%c0_11, %c0_12], %12 {strides = array<i32>} : memref<8x128xf32, #tpu.memory_space<vmem>>, vector<8x128xf32>,
    } else {
    }
    %c0 = arith.constant 0 : index
    %c0_1 = arith.constant 0 : index
    %3 = vector.load %arg6[%c0, %c0_1] : memref<8x128xf32, #tpu.memory_space<vmem>>, vector<8x128xf32>
    %c0_2 = arith.constant 0 : index
    %c0_3 = arith.constant 0 : index
    %4 = vector.load %arg2[%c0_2, %c0_3] : memref<8x64xbf16, #tpu.memory_space<vmem>>, vector<8x64xbf16>
    %c0_4 = arith.constant 0 : index
    %c0_5 = arith.constant 0 : index
    %5 = vector.load %arg3[%c0_4, %c0_5] : memref<64x128xbf16, #tpu.memory_space<vmem>>, vector<64x128xbf16>
    %cst = arith.constant dense<0.000000e+00> : vector<8x128xf32>
    %6 = tpu.matmul %4, %5, %cst {dimension_numbers = #tpu.dot_dimension_numbers<[1], [0], [0], [1], [0, 0, 1, 1], [], []>} : vector<8x64xbf16>, vector<64x128xbf16>, vector<8x128xf32> -> vector<8x128xf32>
    %7 = arith.addf %3, %6 : vector<8x128xf32>
    %c0_6 = arith.constant 0 : index
    %c0_7 = arith.constant 0 : index
    %8 = vector.load %arg6[%c0_6, %c0_7] : memref<8x128xf32, #tpu.memory_space<vmem>>, vector<8x128xf32>
    tpu.vector_store %arg6[%c0_6, %c0_7], %7 {strides = array<i32>} : memref<8x128xf32, #tpu.memory_space<vmem>>, vector<8x128xf32>,
    %c0_i32_8 = arith.constant 0 : i32
    %9 = arith.cmpi eq, %arg1, %c0_i32_8 : i32
    %10 = arith.extui %9 : i1 to i32
    %c0_i32_9 = arith.constant 0 : i32
    %11 = arith.cmpi ne, %10, %c0_i32_9 : i32
    scf.if %11 {
      %c0_10 = arith.constant 0 : index
      %c0_11 = arith.constant 0 : index
      %12 = vector.load %arg6[%c0_10, %c0_11] : memref<8x128xf32, #tpu.memory_space<vmem>>, vector<8x128xf32>
      %13 = arith.truncf %12 : vector<8x128xf32> to vector<8x128xbf16>
      %cst_12 = arith.constant 0.000000e+00 : bf16
      %14 = vector.broadcast %cst_12 : bf16 to vector<8x128xbf16>
      %15 = arith.maximumf %13, %14 : vector<8x128xbf16>
      %c0_13 = arith.constant 0 : index
      %c0_14 = arith.constant 0 : index
      %16 = vector.load %arg4[%c0_13, %c0_14] : memref<128x128xbf16, #tpu.memory_space<vmem>>, vector<128x128xbf16>
      %cst_15 = arith.constant dense<0.000000e+00> : vector<8x128xf32>
      %17 = tpu.matmul %15, %16, %cst_15 {dimension_numbers = #tpu.dot_dimension_numbers<[1], [0], [0], [1], [0, 0, 1, 1], [], []>} : vector<8x128xbf16>, vector<128x128xbf16>, vector<8x128xf32> -> vector<8x128xf32>
      %18 = arith.truncf %17 : vector<8x128xf32> to vector<8x128xbf16>
      %c0_16 = arith.constant 0 : index
      %c0_17 = arith.constant 0 : index
      %19 = vector.load %arg5[%c0_16, %c0_17] : memref<8x128xbf16, #tpu.memory_space<vmem>>, vector<8x128xbf16>
      tpu.vector_store %arg5[%c0_16, %c0_17], %18 {strides = array<i32>} : memref<8x128xbf16, #tpu.memory_space<vmem>>, vector<8x128xbf16>,
    } else {
    }
    return
  }
  func.func @transform_0(%arg0: i32, %arg1: i32) -> (i32, i32) {
    %c0_i32 = arith.constant 0 : i32
    return %arg0, %arg1 : i32, i32
  }
  func.func @transform_1(%arg0: i32, %arg1: i32) -> (i32, i32) {
    %c0_i32 = arith.constant 0 : i32
    %c0_i32_0 = arith.constant 0 : i32
    return %arg1, %c0_i32 : i32, i32
  }
  func.func @transform_2(%arg0: i32, %arg1: i32) -> (i32, i32) {
    %c0_i32 = arith.constant 0 : i32
    %c0_i32_0 = arith.constant 0 : i32
    %c0_i32_1 = arith.constant 0 : i32
    return %c0_i32, %c0_i32_0 : i32, i32
  }
  func.func @transform_3(%arg0: i32, %arg1: i32) -> (i32, i32) {
    %c0_i32 = arith.constant 0 : i32
    %c0_i32_0 = arith.constant 0 : i32
    return %arg0, %c0_i32 : i32, i32
  }
}

</mosaic_0001>

<llo_original>
// kernel: tpu_custom_call.1
$region0: #{tpu_custom_call.1}
  #allocation0 [shape = 'u32[]', space=smem, size = 0x4, offset = 0x4, fixed_abs, tag = 'smem constant byte address 0x4 - core index']
  #allocation1 [shape = 'u32[144,128]{1,0:T(1,128)}', space=vmem, size = 0x12000, scoped, tag = 'internal scratch']
  #allocation2 [shape = 'f32[8,128]{1,0:T(8,128)}', space=vmem, size = 0x1000, scoped, tag = 'scratch operand']
  %s0 = inlined_call_operand.hbm [shape: bf16[8,64], index: 0, kind: input, shape index: {}]
  %s1 = inlined_call_operand.hbm [shape: bf16[64,128], index: 1, kind: input, shape index: {}]
  %s2 = inlined_call_operand.hbm [shape: bf16[128,128], index: 2, kind: input, shape index: {}]
  %s3 = inlined_call_operand.hbm [shape: bf16[8,128], index: 3, kind: output, shape index: {}]
  %s4 = sld [smem:[#allocation0]]
  $region42: #{tpu_custom_call.1} parent=0
    _
  %s6 = ssub.s32 1, %s4
  %s7 = scalar_select 0, %s6, %s4
  $region1: #{tpu_custom_call.1} parent=0
    #allocation3 [shape = 'u8[2048]{0}', space=vmem, size = 0x800, scoped, tag = 'input window, operand 0, single buffered']
    #allocation4 [shape = 's32[1]{0}', space=sflag, size = 0x4, scoped, tag = 'scoped memory for tpu_custom_call.1']
    #allocation5 [shape = 's32[1]{0}', space=sflag, size = 0x4, scoped, tag = 'scoped memory for tpu_custom_call.1']
    #allocation6 [shape = 'u8[16384]{0}', space=vmem, size = 0x4000, scoped, tag = 'input window, operand 1, single buffered']
    #allocation7 [shape = 's32[1]{0}', space=sflag, size = 0x4, scoped, tag = 'scoped memory for tpu_custom_call.1']
    #allocation8 [shape = 'u8[32768]{0}', space=vmem, size = 0x8000, scoped, tag = 'input window, operand 2, single buffered']
    #allocation9 [shape = 'u8[2048]{0}', space=vmem, size = 0x800, scoped, tag = 'output window, operand 0, single buffered']
    %8 = vsyncpa [#allocation4], 0
    %9 = vsyncpa [#allocation7], 0
    %10 = vsyncpa [#allocation5], 0
    // Predicated region
    $region2: #{tpu_custom_call.1} parent=1 // pred_check
      _
    $region3: #{tpu_custom_call.1} parent=1 // pred_check_branch
      %12 = sbr.rel (0) target = $region5
    $region4: #{tpu_custom_call.1} parent=1 // pred_region
      %s14 = ssub.s32 64, 64
      %15 = vsyncadd [#allocation4], %s14
      %s17 = sshll.u32 [#allocation3], 4
      %s18 = int_to_ptr.vmem [resolvable:$true] %s17
      %20 = dma.hbm_to_vmem [thread:$0]  %s0, 64, %s18, [#allocation4]
    $region5: #{tpu_custom_call.1} parent=1 // pred_fallthru
      _
    // Predicated region
    $region6: #{tpu_custom_call.1} parent=1 // pred_check
      _
    $region7: #{tpu_custom_call.1} parent=1 // pred_check_branch
      %22 = sbr.rel (0) target = $region9
    $region8: #{tpu_custom_call.1} parent=1 // pred_region
      %s24 = ssub.s32 512, 512
      %25 = vsyncadd [#allocation7], %s24
      %s26 = sshll.u32 [#allocation6], 4
      %s27 = int_to_ptr.vmem [resolvable:$true] %s26
      %32 = dma.hbm_to_vmem [thread:$0]  %s1, 512, %s27, [#allocation7], 64, 64, 4
    $region9: #{tpu_custom_call.1} parent=1 // pred_fallthru
      _
    // Predicated region
    $region10: #{tpu_custom_call.1} parent=1 // pred_check
      _
    $region11: #{tpu_custom_call.1} parent=1 // pred_check_branch
      %34 = sbr.rel (0) target = $region13
    $region12: #{tpu_custom_call.1} parent=1 // pred_region
      %s36 = ssub.s32 1024, 1024
      %37 = vsyncadd [#allocation7], %s36
      %s38 = sshll.u32 [#allocation8], 4
      %s39 = int_to_ptr.vmem [resolvable:$true] %s38
      %44 = dma.hbm_to_vmem [thread:$0]  %s2, 1024, %s39, [#allocation7], 64, 64, 4
    $region13: #{tpu_custom_call.1} parent=1 // pred_fallthru
      _
    // Predicated region
    $region14: #{tpu_custom_call.1} parent=1 // pred_check
      _
    $region15: #{tpu_custom_call.1} parent=1 // pred_check_branch
      %46 = sbr.rel (0) target = $region17
    $region16: #{tpu_custom_call.1} parent=1 // pred_region
      %47 = dma.done [#allocation4], 64
    $region17: #{tpu_custom_call.1} parent=1 // pred_fallthru
      _
    // Predicated region
    $region18: #{tpu_custom_call.1} parent=1 // pred_check
      _
    $region19: #{tpu_custom_call.1} parent=1 // pred_check_branch
      %49 = sbr.rel (0) target = $region21
    $region20: #{tpu_custom_call.1} parent=1 // pred_region
      %50 = dma.done [#allocation7], 512
    $region21: #{tpu_custom_call.1} parent=1 // pred_fallthru
      _
    // Predicated region
    $region22: #{tpu_custom_call.1} parent=1 // pred_check
      _
    $region23: #{tpu_custom_call.1} parent=1 // pred_check_branch
      %52 = sbr.rel (0) target = $region25
    $region24: #{tpu_custom_call.1} parent=1 // pred_region
      %53 = dma.done [#allocation7], 1024
    $region25: #{tpu_custom_call.1} parent=1 // pred_fallthru
      _
    %p55 = scmp.eq.s32.totalorder 0, 0
    // Predicated region
    $region26: #{tpu_custom_call.1} parent=1 // pred_check
      %p56 = pneg %p55
    $region27: #{tpu_custom_call.1} parent=1 // pred_check_branch
      %58 = sbr.rel (%p56) target = $region29
    $region28: #{tpu_custom_call.1} parent=1 // pred_region
      %59 = vst [vmem:[#allocation2] sm:$0xff] 0.0
    $region29: #{tpu_custom_call.1} parent=1 // pred_fallthru
      _
    %v60 = vld [vmem:[#allocation2] sm:$0xff]
    %v61 = vld [vmem:[#allocation3] sm:$0xf]
    %v62 = vld [vmem:[#allocation6] sm:$0xf]
    %v63 = vld [vmem:[#allocation6 + $0x4] sm:$0xf]
    %v64 = vld [vmem:[#allocation6 + $0x8] sm:$0xf]
    %v65 = vld [vmem:[#allocation6 + $0xc] sm:$0xf]
    %v66 = vld [vmem:[#allocation6 + $0x10] sm:$0xf]
    %v67 = vld [vmem:[#allocation6 + $0x14] sm:$0xf]
    %v68 = vld [vmem:[#allocation6 + $0x18] sm:$0xf]
    %v69 = vld [vmem:[#allocation6 + $0x1c] sm:$0xf]
    %v78 = vunpack.c.l.b16 %v62
    %v79 = vunpack.c.l.b16 %v63
    %v80 = vunpack.c.l.b16 %v64
    %v81 = vunpack.c.l.b16 %v65
    %v82 = vunpack.c.l.b16 %v66
    %v83 = vunpack.c.l.b16 %v67
    %v84 = vunpack.c.l.b16 %v68
    %v85 = vunpack.c.l.b16 %v69
    %v86 = vpack.c.b16 %v79, %v78
    %v87 = vpack.c.b16 %v81, %v80
    %v88 = vpack.c.b16 %v83, %v82
    %v89 = vpack.c.b16 %v85, %v84
    %vm94 = vcmask 523264
    %v96 = vsel %vm94, %v61, 0
    %98 = vmatprep.subr.bf16.mxu0 0
    %99 = vmatpush1.bf16.msra.mxu0 0
    %100 = vmatprep.subr.bf16.mxu0 0
    %101 = vmatpush1.bf16.msra.mxu0 0
    %102 = vmatprep.subr.bf16.mxu0 0
    %103 = vmatpush1.bf16.msra.mxu0 0
    %104 = vmatprep.subr.bf16.mxu0 0
    %105 = vmatpush1.bf16.msra.mxu0 0
    %106 = vmatprep.subr.bf16.mxu0 0
    %107 = vmatpush1.bf16.msra.mxu0 %v89
    %108 = vmatprep.subr.bf16.mxu0 0
    %109 = vmatpush1.bf16.msra.mxu0 %v88
    %110 = vmatprep.subr.bf16.mxu0 0
    %111 = vmatpush1.bf16.msra.mxu0 %v87
    %112 = vmatprep.subr.bf16.mxu0 0
    %113 = vmatpush1.bf16.msra.mxu0 %v86
    %114 = vmatprep.subr.bf16.mxu0 0
    %115 = vmatpush2.bf16.msra.mxu0 0
    %116 = vmatprep.subr.bf16.mxu0 0
    %117 = vmatpush2.bf16.msra.mxu0 0
    %118 = vmatprep.subr.bf16.mxu0 0
    %119 = vmatpush2.bf16.msra.mxu0 0
    %120 = vmatprep.subr.bf16.mxu0 0
    %121 = vmatpush2.bf16.msra.mxu0 0
    %122 = vmatprep.subr.bf16.mxu0 0
    %123 = vmatpush2.bf16.msra.mxu0 0
    %124 = vmatprep.subr.bf16.mxu0 0
    %125 = vmatpush2.bf16.msra.mxu0 0
    %126 = vmatprep.subr.bf16.mxu0 0
    %127 = vmatpush2.bf16.msra.mxu0 0
    %128 = vmatprep.subr.bf16.mxu0 0
    %129 = vmatpush2.bf16.msra.mxu0 0
    %130 = vmatprep.mubr.bf16.mxu0 0
    %131 = vmatmul.mubr.bf16.gmra.mxu0 %v96
    %v132 = vpop.f32.mrf.mxu0
    %v133 = vadd.f32 0.0, %v132
    %v134 = vpop.f32.mrf.mxu0
    %v135 = vpop.f32.mrf.mxu0
    %v136 = vpop.f32.mrf.mxu0
    %137 = vdwg.mxu0
    %v138 = vadd.f32 %v60, %v133
    %139 = vst [vmem:[#allocation2] sm:$0xff] %v138
    // Predicated region
    $region30: #{tpu_custom_call.1} parent=1 // pred_check
      %p140 = pneg %p55
    $region31: #{tpu_custom_call.1} parent=1 // pred_check_branch
      %142 = sbr.rel (%p140) target = $region33
    $region32: #{tpu_custom_call.1} parent=1 // pred_region
      %v143 = vld [vmem:[#allocation2] sm:$0xff]
      %v144 = vpack.c.bf16 %v143, %v143
      %v145 = vmax.bf16 %v144, 0
      %v146 = vld [vmem:[#allocation8] sm:$0xf]
      %v147 = vld [vmem:[#allocation8 + $0x4] sm:$0xf]
      %v148 = vld [vmem:[#allocation8 + $0x8] sm:$0xf]
      %v149 = vld [vmem:[#allocation8 + $0xc] sm:$0xf]
      %v150 = vld [vmem:[#allocation8 + $0x10] sm:$0xf]
      %v151 = vld [vmem:[#allocation8 + $0x14] sm:$0xf]
      %v152 = vld [vmem:[#allocation8 + $0x18] sm:$0xf]
      %v153 = vld [vmem:[#allocation8 + $0x1c] sm:$0xf]
      %v154 = vld [vmem:[#allocation8 + $0x20] sm:$0xf]
      %v155 = vld [vmem:[#allocation8 + $0x24] sm:$0xf]
      %v156 = vld [vmem:[#allocation8 + $0x28] sm:$0xf]
      %v157 = vld [vmem:[#allocation8 + $0x2c] sm:$0xf]
      %v158 = vld [vmem:[#allocation8 + $0x30] sm:$0xf]
      %v159 = vld [vmem:[#allocation8 + $0x34] sm:$0xf]
      %v160 = vld [vmem:[#allocation8 + $0x38] sm:$0xf]
      %v161 = vld [vmem:[#allocation8 + $0x3c] sm:$0xf]
      %v178 = vunpack.c.l.b16 %v146
      %v179 = vunpack.c.l.b16 %v147
      %v180 = vunpack.c.l.b16 %v148
      %v181 = vunpack.c.l.b16 %v149
      %v182 = vunpack.c.l.b16 %v150
      %v183 = vunpack.c.l.b16 %v151
      %v184 = vunpack.c.l.b16 %v152
      %v185 = vunpack.c.l.b16 %v153
      %v186 = vunpack.c.l.b16 %v154
      %v187 = vunpack.c.l.b16 %v155
      %v188 = vunpack.c.l.b16 %v156
      %v189 = vunpack.c.l.b16 %v157
      %v190 = vunpack.c.l.b16 %v158
      %v191 = vunpack.c.l.b16 %v159
      %v192 = vunpack.c.l.b16 %v160
      %v193 = vunpack.c.l.b16 %v161
      %v194 = vpack.c.b16 %v179, %v178
      %v195 = vpack.c.b16 %v181, %v180
      %v196 = vpack.c.b16 %v183, %v182
      %v197 = vpack.c.b16 %v185, %v184
      %v198 = vpack.c.b16 %v187, %v186
      %v199 = vpack.c.b16 %v189, %v188
      %v200 = vpack.c.b16 %v191, %v190
      %v201 = vpack.c.b16 %v193, %v192
      %210 = vmatprep.subr.bf16.mxu0 0
      %211 = vmatpush1.bf16.msra.mxu0 %v201
      %212 = vmatprep.subr.bf16.mxu0 0
      %213 = vmatpush1.bf16.msra.mxu0 %v200
      %214 = vmatprep.subr.bf16.mxu0 0
      %215 = vmatpush1.bf16.msra.mxu0 %v199
      %216 = vmatprep.subr.bf16.mxu0 0
      %217 = vmatpush1.bf16.msra.mxu0 %v198
      %218 = vmatprep.subr.bf16.mxu0 0
      %219 = vmatpush1.bf16.msra.mxu0 %v197
      %220 = vmatprep.subr.bf16.mxu0 0
      %221 = vmatpush1.bf16.msra.mxu0 %v196
      %222 = vmatprep.subr.bf16.mxu0 0
      %223 = vmatpush1.bf16.msra.mxu0 %v195
      %224 = vmatprep.subr.bf16.mxu0 0
      %225 = vmatpush1.bf16.msra.mxu0 %v194
      %226 = vmatprep.subr.bf16.mxu0 0
      %227 = vmatpush2.bf16.msra.mxu0 0
      %228 = vmatprep.subr.bf16.mxu0 0
      %229 = vmatpush2.bf16.msra.mxu0 0
      %230 = vmatprep.subr.bf16.mxu0 0
      %231 = vmatpush2.bf16.msra.mxu0 0
      %232 = vmatprep.subr.bf16.mxu0 0
      %233 = vmatpush2.bf16.msra.mxu0 0
      %234 = vmatprep.subr.bf16.mxu0 0
      %235 = vmatpush2.bf16.msra.mxu0 0
      %236 = vmatprep.subr.bf16.mxu0 0
      %237 = vmatpush2.bf16.msra.mxu0 0
      %238 = vmatprep.subr.bf16.mxu0 0
      %239 = vmatpush2.bf16.msra.mxu0 0
      %240 = vmatprep.subr.bf16.mxu0 0
      %241 = vmatpush2.bf16.msra.mxu0 0
      %242 = vmatprep.mubr.bf16.mxu0 0
      %243 = vmatmul.mubr.bf16.gmra.mxu0 %v145
      %v244 = vpop.f32.mrf.mxu0
      %v245 = vadd.f32 0.0, %v244
      %v246 = vpop.f32.mrf.mxu0
      %v247 = vpop.f32.mrf.mxu0
      %v248 = vpop.f32.mrf.mxu0
      %249 = vdwg.mxu0
      %v250 = vpack.c.bf16 %v245, %v245
      %251 = vst [vmem:[#allocation9] sm:$0xf] %v250
    $region33: #{tpu_custom_call.1} parent=1 // pred_fallthru
      _
    // Predicated region
    $region34: #{tpu_custom_call.1} parent=1 // pred_check
      _
    $region35: #{tpu_custom_call.1} parent=1 // pred_check_branch
      %253 = sbr.rel (0) target = $region37
    $region36: #{tpu_custom_call.1} parent=1 // pred_region
      %s255 = ssub.s32 64, 64
      %256 = vsyncadd [#allocation5], %s255
      %s258 = sshll.u32 [#allocation9], 4
      %s259 = int_to_ptr.vmem [resolvable:$true] %s258
      %261 = dma.vmem_to_hbm [thread:$0]  %s259, 64, %s3, [#allocation5]
    $region37: #{tpu_custom_call.1} parent=1 // pred_fallthru
      _
    // Predicated region
    $region38: #{tpu_custom_call.1} parent=1 // pred_check
      _
    $region39: #{tpu_custom_call.1} parent=1 // pred_check_branch
      %263 = sbr.rel (0) target = $region41
    $region40: #{tpu_custom_call.1} parent=1 // pred_region
      %264 = dma.done [#allocation5], 64
    $region41: #{tpu_custom_call.1} parent=1 // pred_fallthru
      _
    %265 = vsyncpa [#allocation4], 1
    %266 = vsyncpa [#allocation7], 1
    %267 = vsyncpa [#allocation5], 1

// kernel: tpu_custom_call.1
$region0: #{tpu_custom_call.1}
  #allocation0 [shape = 'u32[]', space=smem, size = 0x4, offset = 0x4, fixed_abs, tag = 'smem constant byte address 0x4 - core index']
  #allocation1 [shape = 'u32[144,128]{1,0:T(1,128)}', space=vmem, size = 0x12000, scoped, tag = 'internal scratch']
  #allocation2 [shape = 'f32[8,128]{1,0:T(8,128)}', space=vmem, size = 0x1000, scoped, tag = 'scratch operand']
  %s0 = inlined_call_operand.hbm [shape: bf16[8,64], index: 0, kind: input, shape index: {}]
  %s1 = inlined_call_operand.hbm [shape: bf16[64,128], index: 1, kind: input, shape index: {}]
  %s2 = inlined_call_operand.hbm [shape: bf16[128,128], index: 2, kind: input, shape index: {}]
  %s3 = inlined_call_operand.hbm [shape: bf16[8,128], index: 3, kind: output, shape index: {}]
  %s4 = sld [smem:[#allocation0]]
  $region42: #{tpu_custom_call.1} parent=0
    _
  %s6 = ssub.s32 1, %s4
  %s7 = scalar_select 0, %s6, %s4
  $region1: #{tpu_custom_call.1} parent=0
    #allocation3 [shape = 'u8[2048]{0}', space=vmem, size = 0x800, scoped, tag = 'input window, operand 0, single buffered']
    #allocation4 [shape = 's32[1]{0}', space=sflag, size = 0x4, scoped, tag = 'scoped memory for tpu_custom_call.1']
    #allocation5 [shape = 's32[1]{0}', space=sflag, size = 0x4, scoped, tag = 'scoped memory for tpu_custom_call.1']
    #allocation6 [shape = 'u8[16384]{0}', space=vmem, size = 0x4000, scoped, tag = 'input window, operand 1, single buffered']
    #allocation7 [shape = 's32[1]{0}', space=sflag, size = 0x4, scoped, tag = 'scoped memory for tpu_custom_call.1']
    #allocation8 [shape = 'u8[32768]{0}', space=vmem, size = 0x8000, scoped, tag = 'input window, operand 2, single buffered']
    #allocation9 [shape = 'u8[2048]{0}', space=vmem, size = 0x800, scoped, tag = 'output window, operand 0, single buffered']
    %8 = vsyncpa [#allocation4], 0
    %9 = vsyncpa [#allocation7], 0
    %10 = vsyncpa [#allocation5], 0
    // Predicated region
    $region2: #{tpu_custom_call.1} parent=1 // pred_check
      _
    $region3: #{tpu_custom_call.1} parent=1 // pred_check_branch
      %12 = sbr.rel (0) target = $region5
    $region4: #{tpu_custom_call.1} parent=1 // pred_region
      %s14 = ssub.s32 64, 64
      %15 = vsyncadd [#allocation4], %s14
      %s17 = sshll.u32 [#allocation3], 4
      %s18 = int_to_ptr.vmem [resolvable:$true] %s17
      %20 = dma.hbm_to_vmem [thread:$0]  %s0, 64, %s18, [#allocation4]
    $region5: #{tpu_custom_call.1} parent=1 // pred_fallthru
      _
    // Predicated region
    $region6: #{tpu_custom_call.1} parent=1 // pred_check
      _
    $region7: #{tpu_custom_call.1} parent=1 // pred_check_branch
      %22 = sbr.rel (0) target = $region9
    $region8: #{tpu_custom_call.1} parent=1 // pred_region
      %s24 = ssub.s32 512, 512
      %25 = vsyncadd [#allocation7], %s24
      %s26 = sshll.u32 [#allocation6], 4
      %s27 = int_to_ptr.vmem [resolvable:$true] %s26
      %32 = dma.hbm_to_vmem [thread:$0]  %s1, 512, %s27, [#allocation7], 64, 64, 4
    $region9: #{tpu_custom_call.1} parent=1 // pred_fallthru
      _
    // Predicated region
    $region10: #{tpu_custom_call.1} parent=1 // pred_check
      _
    $region11: #{tpu_custom_call.1} parent=1 // pred_check_branch
      %34 = sbr.rel (0) target = $region13
    $region12: #{tpu_custom_call.1} parent=1 // pred_region
      %s36 = ssub.s32 1024, 1024
      %37 = vsyncadd [#allocation7], %s36
      %s38 = sshll.u32 [#allocation8], 4
      %s39 = int_to_ptr.vmem [resolvable:$true] %s38
      %44 = dma.hbm_to_vmem [thread:$0]  %s2, 1024, %s39, [#allocation7], 64, 64, 4
    $region13: #{tpu_custom_call.1} parent=1 // pred_fallthru
      _
    // Predicated region
    $region14: #{tpu_custom_call.1} parent=1 // pred_check
      _
    $region15: #{tpu_custom_call.1} parent=1 // pred_check_branch
      %46 = sbr.rel (0) target = $region17
    $region16: #{tpu_custom_call.1} parent=1 // pred_region
      %47 = dma.done [#allocation4], 64
    $region17: #{tpu_custom_call.1} parent=1 // pred_fallthru
      _
    // Predicated region
    $region18: #{tpu_custom_call.1} parent=1 // pred_check
      _
    $region19: #{tpu_custom_call.1} parent=1 // pred_check_branch
      %49 = sbr.rel (0) target = $region21
    $region20: #{tpu_custom_call.1} parent=1 // pred_region
      %50 = dma.done [#allocation7], 512
    $region21: #{tpu_custom_call.1} parent=1 // pred_fallthru
      _
    // Predicated region
    $region22: #{tpu_custom_call.1} parent=1 // pred_check
      _
    $region23: #{tpu_custom_call.1} parent=1 // pred_check_branch
      %52 = sbr.rel (0) target = $region25
    $region24: #{tpu_custom_call.1} parent=1 // pred_region
      %53 = dma.done [#allocation7], 1024
    $region25: #{tpu_custom_call.1} parent=1 // pred_fallthru
      _
    %p55 = scmp.eq.s32.totalorder 0, 0
    // Predicated region
    $region26: #{tpu_custom_call.1} parent=1 // pred_check
      %p56 = pneg %p55
    $region27: #{tpu_custom_call.1} parent=1 // pred_check_branch
      %58 = sbr.rel (%p56) target = $region29
    $region28: #{tpu_custom_call.1} parent=1 // pred_region
      %59 = vst [vmem:[#allocation2] sm:$0xff] 0.0
    $region29: #{tpu_custom_call.1} parent=1 // pred_fallthru
      _
    %v60 = vld [vmem:[#allocation2] sm:$0xff]
    %v61 = vld [vmem:[#allocation3] sm:$0xf]
    %v62 = vld [vmem:[#allocation6] sm:$0xf]
    %v63 = vld [vmem:[#allocation6 + $0x4] sm:$0xf]
    %v64 = vld [vmem:[#allocation6 + $0x8] sm:$0xf]
    %v65 = vld [vmem:[#allocation6 + $0xc] sm:$0xf]
    %v66 = vld [vmem:[#allocation6 + $0x10] sm:$0xf]
    %v67 = vld [vmem:[#allocation6 + $0x14] sm:$0xf]
    %v68 = vld [vmem:[#allocation6 + $0x18] sm:$0xf]
    %v69 = vld [vmem:[#allocation6 + $0x1c] sm:$0xf]
    %v78 = vunpack.c.l.b16 %v62
    %v79 = vunpack.c.l.b16 %v63
    %v80 = vunpack.c.l.b16 %v64
    %v81 = vunpack.c.l.b16 %v65
    %v82 = vunpack.c.l.b16 %v66
    %v83 = vunpack.c.l.b16 %v67
    %v84 = vunpack.c.l.b16 %v68
    %v85 = vunpack.c.l.b16 %v69
    %v86 = vpack.c.b16 %v79, %v78
    %v87 = vpack.c.b16 %v81, %v80
    %v88 = vpack.c.b16 %v83, %v82
    %v89 = vpack.c.b16 %v85, %v84
    %vm94 = vcmask 523264
    %v96 = vsel %vm94, %v61, 0
    %98 = vmatprep.subr.bf16.mxu0 0
    %99 = vmatpush1.bf16.msra.mxu0 0
    %100 = vmatprep.subr.bf16.mxu0 0
    %101 = vmatpush1.bf16.msra.mxu0 0
    %102 = vmatprep.subr.bf16.mxu0 0
    %103 = vmatpush1.bf16.msra.mxu0 0
    %104 = vmatprep.subr.bf16.mxu0 0
    %105 = vmatpush1.bf16.msra.mxu0 0
    %106 = vmatprep.subr.bf16.mxu0 0
    %107 = vmatpush1.bf16.msra.mxu0 %v89
    %108 = vmatprep.subr.bf16.mxu0 0
    %109 = vmatpush1.bf16.msra.mxu0 %v88
    %110 = vmatprep.subr.bf16.mxu0 0
    %111 = vmatpush1.bf16.msra.mxu0 %v87
    %112 = vmatprep.subr.bf16.mxu0 0
    %113 = vmatpush1.bf16.msra.mxu0 %v86
    %114 = vmatprep.subr.bf16.mxu0 0
    %115 = vmatpush2.bf16.msra.mxu0 0
    %116 = vmatprep.subr.bf16.mxu0 0
    %117 = vmatpush2.bf16.msra.mxu0 0
    %118 = vmatprep.subr.bf16.mxu0 0
    %119 = vmatpush2.bf16.msra.mxu0 0
    %120 = vmatprep.subr.bf16.mxu0 0
    %121 = vmatpush2.bf16.msra.mxu0 0
    %122 = vmatprep.subr.bf16.mxu0 0
    %123 = vmatpush2.bf16.msra.mxu0 0
    %124 = vmatprep.subr.bf16.mxu0 0
    %125 = vmatpush2.bf16.msra.mxu0 0
    %126 = vmatprep.subr.bf16.mxu0 0
    %127 = vmatpush2.bf16.msra.mxu0 0
    %128 = vmatprep.subr.bf16.mxu0 0
    %129 = vmatpush2.bf16.msra.mxu0 0
    %130 = vmatprep.mubr.bf16.mxu0 0
    %131 = vmatmul.mubr.bf16.gmra.mxu0 %v96
    %v132 = vpop.f32.mrf.mxu0
    %v133 = vadd.f32 0.0, %v132
    %v134 = vpop.f32.mrf.mxu0
    %v135 = vpop.f32.mrf.mxu0
    %v136 = vpop.f32.mrf.mxu0
    %137 = vdwg.mxu0
    %v138 = vadd.f32 %v60, %v133
    %139 = vst [vmem:[#allocation2] sm:$0xff] %v138
    // Predicated region
    $region30: #{tpu_custom_call.1} parent=1 // pred_check
      %p140 = pneg %p55
    $region31: #{tpu_custom_call.1} parent=1 // pred_check_branch
      %142 = sbr.rel (%p140) target = $region33
    $region32: #{tpu_custom_call.1} parent=1 // pred_region
      %v143 = vld [vmem:[#allocation2] sm:$0xff]
      %v144 = vpack.c.bf16 %v143, %v143
      %v145 = vmax.bf16 %v144, 0
      %v146 = vld [vmem:[#allocation8] sm:$0xf]
      %v147 = vld [vmem:[#allocation8 + $0x4] sm:$0xf]
      %v148 = vld [vmem:[#allocation8 + $0x8] sm:$0xf]
      %v149 = vld [vmem:[#allocation8 + $0xc] sm:$0xf]
      %v150 = vld [vmem:[#allocation8 + $0x10] sm:$0xf]
      %v151 = vld [vmem:[#allocation8 + $0x14] sm:$0xf]
      %v152 = vld [vmem:[#allocation8 + $0x18] sm:$0xf]
      %v153 = vld [vmem:[#allocation8 + $0x1c] sm:$0xf]
      %v154 = vld [vmem:[#allocation8 + $0x20] sm:$0xf]
      %v155 = vld [vmem:[#allocation8 + $0x24] sm:$0xf]
      %v156 = vld [vmem:[#allocation8 + $0x28] sm:$0xf]
      %v157 = vld [vmem:[#allocation8 + $0x2c] sm:$0xf]
      %v158 = vld [vmem:[#allocation8 + $0x30] sm:$0xf]
      %v159 = vld [vmem:[#allocation8 + $0x34] sm:$0xf]
      %v160 = vld [vmem:[#allocation8 + $0x38] sm:$0xf]
      %v161 = vld [vmem:[#allocation8 + $0x3c] sm:$0xf]
      %v178 = vunpack.c.l.b16 %v146
      %v179 = vunpack.c.l.b16 %v147
      %v180 = vunpack.c.l.b16 %v148
      %v181 = vunpack.c.l.b16 %v149
      %v182 = vunpack.c.l.b16 %v150
      %v183 = vunpack.c.l.b16 %v151
      %v184 = vunpack.c.l.b16 %v152
      %v185 = vunpack.c.l.b16 %v153
      %v186 = vunpack.c.l.b16 %v154
      %v187 = vunpack.c.l.b16 %v155
      %v188 = vunpack.c.l.b16 %v156
      %v189 = vunpack.c.l.b16 %v157
      %v190 = vunpack.c.l.b16 %v158
      %v191 = vunpack.c.l.b16 %v159
      %v192 = vunpack.c.l.b16 %v160
      %v193 = vunpack.c.l.b16 %v161
      %v194 = vpack.c.b16 %v179, %v178
      %v195 = vpack.c.b16 %v181, %v180
      %v196 = vpack.c.b16 %v183, %v182
      %v197 = vpack.c.b16 %v185, %v184
      %v198 = vpack.c.b16 %v187, %v186
      %v199 = vpack.c.b16 %v189, %v188
      %v200 = vpack.c.b16 %v191, %v190
      %v201 = vpack.c.b16 %v193, %v192
      %210 = vmatprep.subr.bf16.mxu0 0
      %211 = vmatpush1.bf16.msra.mxu0 %v201
      %212 = vmatprep.subr.bf16.mxu0 0
      %213 = vmatpush1.bf16.msra.mxu0 %v200
      %214 = vmatprep.subr.bf16.mxu0 0
      %215 = vmatpush1.bf16.msra.mxu0 %v199
      %216 = vmatprep.subr.bf16.mxu0 0
      %217 = vmatpush1.bf16.msra.mxu0 %v198
      %218 = vmatprep.subr.bf16.mxu0 0
      %219 = vmatpush1.bf16.msra.mxu0 %v197
      %220 = vmatprep.subr.bf16.mxu0 0
      %221 = vmatpush1.bf16.msra.mxu0 %v196
      %222 = vmatprep.subr.bf16.mxu0 0
      %223 = vmatpush1.bf16.msra.mxu0 %v195
      %224 = vmatprep.subr.bf16.mxu0 0
      %225 = vmatpush1.bf16.msra.mxu0 %v194
      %226 = vmatprep.subr.bf16.mxu0 0
      %227 = vmatpush2.bf16.msra.mxu0 0
      %228 = vmatprep.subr.bf16.mxu0 0
      %229 = vmatpush2.bf16.msra.mxu0 0
      %230 = vmatprep.subr.bf16.mxu0 0
      %231 = vmatpush2.bf16.msra.mxu0 0
      %232 = vmatprep.subr.bf16.mxu0 0
      %233 = vmatpush2.bf16.msra.mxu0 0
      %234 = vmatprep.subr.bf16.mxu0 0
      %235 = vmatpush2.bf16.msra.mxu0 0
      %236 = vmatprep.subr.bf16.mxu0 0
      %237 = vmatpush2.bf16.msra.mxu0 0
      %238 = vmatprep.subr.bf16.mxu0 0
      %239 = vmatpush2.bf16.msra.mxu0 0
      %240 = vmatprep.subr.bf16.mxu0 0
      %241 = vmatpush2.bf16.msra.mxu0 0
      %242 = vmatprep.mubr.bf16.mxu0 0
      %243 = vmatmul.mubr.bf16.gmra.mxu0 %v145
      %v244 = vpop.f32.mrf.mxu0
      %v245 = vadd.f32 0.0, %v244
      %v246 = vpop.f32.mrf.mxu0
      %v247 = vpop.f32.mrf.mxu0
      %v248 = vpop.f32.mrf.mxu0
      %249 = vdwg.mxu0
      %v250 = vpack.c.bf16 %v245, %v245
      %251 = vst [vmem:[#allocation9] sm:$0xf] %v250
    $region33: #{tpu_custom_call.1} parent=1 // pred_fallthru
      _
    // Predicated region
    $region34: #{tpu_custom_call.1} parent=1 // pred_check
      _
    $region35: #{tpu_custom_call.1} parent=1 // pred_check_branch
      %253 = sbr.rel (0) target = $region37
    $region36: #{tpu_custom_call.1} parent=1 // pred_region
      %s255 = ssub.s32 64, 64
      %256 = vsyncadd [#allocation5], %s255
      %s258 = sshll.u32 [#allocation9], 4
      %s259 = int_to_ptr.vmem [resolvable:$true] %s258
      %261 = dma.vmem_to_hbm [thread:$0]  %s259, 64, %s3, [#allocation5]
    $region37: #{tpu_custom_call.1} parent=1 // pred_fallthru
      _
    // Predicated region
    $region38: #{tpu_custom_call.1} parent=1 // pred_check
      _
    $region39: #{tpu_custom_call.1} parent=1 // pred_check_branch
      %263 = sbr.rel (0) target = $region41
    $region40: #{tpu_custom_call.1} parent=1 // pred_region
      %264 = dma.done [#allocation5], 64
    $region41: #{tpu_custom_call.1} parent=1 // pred_fallthru
      _
    %265 = vsyncpa [#allocation4], 1
    %266 = vsyncpa [#allocation7], 1
    %267 = vsyncpa [#allocation5], 1

</llo_original>
